<compile_context>
chip_gen: v7x
topology: tpu7x:2x2x1
jax: 0.10.0
libtpu: 0.0.40
codegen_flags: <defaults>
</compile_context>

<pallas_src>
import jax
import jax.numpy as jnp
from jax.experimental import pallas as pl
from jax.experimental.pallas import tpu as pltpu


def binary_sum_kernel(x1_ref, x2_ref, v_ref, c_ref, out_ref):
    """One batch tile: out = (x1 + x2) · v_eff + c   (all f32, VPU + lane reduce)."""
    s = x1_ref[...] + x2_ref[...]                                  # (TB, 128) f32
    out = jnp.sum(s * v_ref[...], axis=-1, keepdims=True)         # (TB, 1)  f32
    out_ref[...] = (out + c_ref[...]).astype(out_ref.dtype)


def prepare_params(params):
    """One-time algebraic collapse of the affine network (f32, HIGHEST precision).

    v_eff = W1^T @ W2^T @ w3   (128,)
    c     = 2*w3·(W2 @ b1 + b2) + b3
    """
    w1, b1, w2, b2, w3, b3 = params
    hp = jax.lax.Precision.HIGHEST

    w3_vec = w3.reshape(-1)                                  # (512,)
    u = jnp.dot(w2.T, w3_vec, precision=hp)                  # (1024,) = W2^T w3
    v_eff = jnp.dot(w1.T, u, precision=hp)                   # (128,)  = W1^T W2^T w3
    c = (2.0 * jnp.dot(b1, u, precision=hp)
         + 2.0 * jnp.dot(b2, w3_vec, precision=hp)
         + b3[0])

    return dict(
        v=v_eff.reshape(1, 128).astype(jnp.float32),          # (1, 128) f32
        c=jnp.reshape(c, (1, 1)).astype(jnp.float32),         # (1, 1)   f32
    )


def binary_sum_forward(x1, x2, p):
    """Forward pass. x1, x2: (B, 128) f32. Returns (B, 1) f32."""
    B, F = x1.shape
    assert F == 128 and x2.shape == (B, F)

    # Batch tile: a single block at small B; for larger B split into >=2
    # sublane-aligned tiles (up to 512 rows) so the parallel grid axis can be
    # sharded across v7x's two TensorCores (no effect on v5e/v6e).
    if B <= 128:
        TB = B
    else:
        half = pl.cdiv(B, 2)
        TB = min(512, ((half + 7) // 8) * 8)
    grid = (pl.cdiv(B, TB),)

    args = (x1, x2, p["v"], p["c"])

    # Advisory cost estimate (kernel is input-DMA bound).
    flops = 4 * B * 128 + 2 * B          # add + mul + lane-reduce + bias
    bytes_accessed = sum(int(a.nbytes) for a in args) + B * 4

    weight_spec = lambda shape: pl.BlockSpec(shape, lambda i: (0, 0))

    return pl.pallas_call(
        binary_sum_kernel,
        out_shape=jax.ShapeDtypeStruct((B, 1), jnp.float32),
        grid=grid,
        in_specs=[
            pl.BlockSpec((TB, 128), lambda i: (i, 0)),   # x1 tile
            pl.BlockSpec((TB, 128), lambda i: (i, 0)),   # x2 tile
            weight_spec((1, 128)),                       # v_eff row (f32)
            weight_spec((1, 1)),                         # c scalar
        ],
        out_specs=pl.BlockSpec((TB, 1), lambda i: (i, 0)),
        compiler_params=pltpu.CompilerParams(
            dimension_semantics=("parallel",)),
        cost_estimate=pl.CostEstimate(
            flops=flops, transcendentals=0, bytes_accessed=bytes_accessed),
    )(*args)


def init_params(key):
    """Deterministic init matching nn.Linear shapes/ranges
    (uniform(-1/sqrt(fan_in), 1/sqrt(fan_in)), like PyTorch default)."""
    def linear(key, out_f, in_f):
        kw, kb = jax.random.split(key)
        bound = 1.0 / jnp.sqrt(jnp.float32(in_f))
        w = jax.random.uniform(kw, (out_f, in_f), jnp.float32, -bound, bound)
        b = jax.random.uniform(kb, (out_f,), jnp.float32, -bound, bound)
        return w, b

    k1, k2, k3 = jax.random.split(key, 3)
    w1, b1 = linear(k1, 1024, 128)
    w2, b2 = linear(k2, 512, 1024)
    w3, b3 = linear(k3, 1, 512)
    return w1, b1, w2, b2, w3, b3


def reference_forward_f32(x1, x2, params):
    """Plain-JAX f32 reference mirroring the PyTorch module exactly
    (HIGHEST precision so the comparison is against true f32 math)."""
    w1, b1, w2, b2, w3, b3 = params
    hp = jax.lax.Precision.HIGHEST

    def shared(x):
        x = jnp.dot(x, w1.T, precision=hp) + b1
        x = jnp.dot(x, w2.T, precision=hp) + b2
        return x

    combined = shared(x1) + shared(x2)
    return jnp.dot(combined, w3.T, precision=hp) + b3


if __name__ == "__main__":
    key = jax.random.PRNGKey(0)
    kp, kx1, kx2 = jax.random.split(key, 3)

    B = 8  # input feature dim is fixed at 128 by the module
    params = init_params(kp)
    prepared = prepare_params(params)
    x1 = jax.random.normal(kx1, (B, 128), jnp.float32)
    x2 = jax.random.normal(kx2, (B, 128), jnp.float32)

    fwd = jax.jit(binary_sum_forward)
    out = jax.block_until_ready(fwd(x1, x2, prepared))

    assert out.shape == (B, 1)

    # Forward semantics match the original f32 module (pure f32 path now;
    # only reassociation differences remain).
    ref_f32 = reference_forward_f32(x1, x2, params)
    assert jnp.allclose(out, ref_f32, atol=2e-3, rtol=2e-3), (out, ref_f32)

    print("KERNEL_OK")
</pallas_src>

<mosaic_0001>
module attributes {stable_mosaic.version = 11 : i64} {
  func.func @binary_sum_kernel(%arg0: i32, %arg1: memref<8x128xf32, #tpu.memory_space<vmem>>, %arg2: memref<8x128xf32, #tpu.memory_space<vmem>>, %arg3: memref<1x128xf32, #tpu.memory_space<vmem>>, %arg4: memref<1x1xf32, #tpu.memory_space<vmem>>, %arg5: memref<8x1xf32, #tpu.memory_space<vmem>>) attributes {dimension_semantics = [#tpu.dimension_semantics<parallel>], iteration_bounds = array<i64: 1>, scalar_prefetch = 0 : i64, scratch_operands = 0 : i64, tpu.core_type = #tpu.core_type<tc>, window_params = [{transform_indices = @transform_0, window_bounds = array<i64: 8, 128>}, {transform_indices = @transform_1, window_bounds = array<i64: 8, 128>}, {pipeline_mode = #tpu.pipeline_mode<synchronous>, transform_indices = @transform_2, window_bounds = array<i64: 1, 128>}, {pipeline_mode = #tpu.pipeline_mode<synchronous>, transform_indices = @transform_3, window_bounds = array<i64: 1, 1>}, {transform_indices = @transform_4, window_bounds = array<i64: 8, 1>}]} {
    %c0 = arith.constant 0 : index
    %c0_0 = arith.constant 0 : index
    %0 = vector.load %arg1[%c0, %c0_0] : memref<8x128xf32, #tpu.memory_space<vmem>>, vector<8x128xf32>
    %c0_1 = arith.constant 0 : index
    %c0_2 = arith.constant 0 : index
    %1 = vector.load %arg2[%c0_1, %c0_2] : memref<8x128xf32, #tpu.memory_space<vmem>>, vector<8x128xf32>
    %2 = arith.addf %0, %1 : vector<8x128xf32>
    %c0_3 = arith.constant 0 : index
    %c0_4 = arith.constant 0 : index
    %3 = vector.load %arg3[%c0_3, %c0_4] : memref<1x128xf32, #tpu.memory_space<vmem>>, vector<1x128xf32>
    %4 = vector.broadcast %3 : vector<1x128xf32> to vector<8x128xf32>
    %5 = arith.mulf %2, %4 : vector<8x128xf32>
    %cst = arith.constant dense<0.000000e+00> : vector<8xf32>
    %6 = vector.multi_reduction <add>, %5, %cst [1] : vector<8x128xf32> to vector<8xf32>
    %7 = vector.shape_cast %6 : vector<8xf32> to vector<8x1xf32>
    %c0_5 = arith.constant 0 : index
    %c0_6 = arith.constant 0 : index
    %8 = vector.load %arg4[%c0_5, %c0_6] : memref<1x1xf32, #tpu.memory_space<vmem>>, vector<1x1xf32>
    %9 = vector.broadcast %8 : vector<1x1xf32> to vector<8x1xf32>
    %10 = arith.addf %7, %9 : vector<8x1xf32>
    %c0_7 = arith.constant 0 : index
    %c0_8 = arith.constant 0 : index
    %11 = vector.load %arg5[%c0_7, %c0_8] : memref<8x1xf32, #tpu.memory_space<vmem>>, vector<8x1xf32>
    tpu.vector_store %arg5[%c0_7, %c0_8], %10 {strides = array<i32>} : memref<8x1xf32, #tpu.memory_space<vmem>>, vector<8x1xf32>,
    return
  }
  func.func @transform_0(%arg0: i32) -> (i32, i32) {
    %c0_i32 = arith.constant 0 : i32
    %c0_i32_0 = arith.constant 0 : i32
    return %arg0, %c0_i32 : i32, i32
  }
  func.func @transform_1(%arg0: i32) -> (i32, i32) {
    %c0_i32 = arith.constant 0 : i32
    %c0_i32_0 = arith.constant 0 : i32
    return %arg0, %c0_i32 : i32, i32
  }
  func.func @transform_2(%arg0: i32) -> (i32, i32) {
    %c0_i32 = arith.constant 0 : i32
    %c0_i32_0 = arith.constant 0 : i32
    %c0_i32_1 = arith.constant 0 : i32
    return %c0_i32, %c0_i32_0 : i32, i32
  }
  func.func @transform_3(%arg0: i32) -> (i32, i32) {
    %c0_i32 = arith.constant 0 : i32
    %c0_i32_0 = arith.constant 0 : i32
    %c0_i32_1 = arith.constant 0 : i32
    return %c0_i32, %c0_i32_0 : i32, i32
  }
  func.func @transform_4(%arg0: i32) -> (i32, i32) {
    %c0_i32 = arith.constant 0 : i32
    %c0_i32_0 = arith.constant 0 : i32
    return %arg0, %c0_i32 : i32, i32
  }
}

</mosaic_0001>

<llo_original>
// kernel: binary_sum_forward.1
$region0: #{binary_sum_forward.1}
  #allocation0 [shape = 'u32[]', space=smem, size = 0x4, offset = 0x4, fixed_abs, tag = 'smem constant byte address 0x4 - core index']
  #allocation1 [shape = 'u32[144,128]{1,0:T(1,128)}', space=vmem, size = 0x12000, scoped, tag = 'internal scratch']
  #allocation2 [shape = 'f32[1,1]{1,0:T(1,128)S(1)}', space=vmem, size = 0x200, scoped, tag = 'scoped memory for binary_sum_forward.1']
  %s0 = inlined_call_operand.hbm [shape: f32[8,128], index: 0, kind: input, shape index: {}]
  %s1 = inlined_call_operand.hbm [shape: f32[8,128], index: 1, kind: input, shape index: {}]
  %s2 = inlined_call_operand.vmem [shape: f32[1,128], index: 2, kind: input, shape index: {}]
  %s3 = inlined_call_operand.<no memory space> [shape: f32[1,1], index: 3, kind: input, shape index: {}]
  %s4 = inlined_call_operand.vmem [shape: f32[8,1], index: 4, kind: output, shape index: {}]
  %s5 = sld [smem:[#allocation0]]
  $region34: #{binary_sum_forward.1} parent=0
    _
  %s7 = ssub.s32 1, %s5
  %s8 = scalar_select 0, %s7, %s5
  %v9 = vstv %s3
  %10 = vst [vmem:[#allocation2] sm:$0x1] %v9
  $region1: #{binary_sum_forward.1} parent=0
    #allocation3 [shape = 'u8[4096]{0}', space=vmem, size = 0x1000, scoped, tag = 'input window, operand 0, single buffered']
    #allocation4 [shape = 's32[1]{0}', space=sflag, size = 0x4, scoped, tag = 'scoped memory for binary_sum_forward.1']
    #allocation5 [shape = 'u8[4096]{0}', space=vmem, size = 0x1000, scoped, tag = 'input window, operand 1, single buffered']
    #allocation6 [shape = 's32[1]{0}', space=sflag, size = 0x4, scoped, tag = 'scoped memory for binary_sum_forward.1']
    %11 = vsyncpa [#allocation4], 0
    %12 = vsyncpa [#allocation6], 0
    // Predicated region
    $region2: #{binary_sum_forward.1} parent=1 // pred_check
      _
    $region3: #{binary_sum_forward.1} parent=1 // pred_check_branch
      %14 = sbr.rel (0) target = $region5
    $region4: #{binary_sum_forward.1} parent=1 // pred_region
      %s16 = ssub.s32 128, 128
      %17 = vsyncadd [#allocation4], %s16
      %s19 = sshll.u32 [#allocation3], 4
      %s20 = int_to_ptr.vmem [resolvable:$true] %s19
      %22 = dma.hbm_to_vmem [thread:$0]  %s0, 128, %s20, [#allocation4]
    $region5: #{binary_sum_forward.1} parent=1 // pred_fallthru
      _
    // Predicated region
    $region6: #{binary_sum_forward.1} parent=1 // pred_check
      _
    $region7: #{binary_sum_forward.1} parent=1 // pred_check_branch
      %24 = sbr.rel (0) target = $region9
    $region8: #{binary_sum_forward.1} parent=1 // pred_region
      %s26 = ssub.s32 128, 128
      %27 = vsyncadd [#allocation6], %s26
      %s29 = sshll.u32 [#allocation5], 4
      %s30 = int_to_ptr.vmem [resolvable:$true] %s29
      %32 = dma.hbm_to_vmem [thread:$0]  %s1, 128, %s30, [#allocation6]
    $region9: #{binary_sum_forward.1} parent=1 // pred_fallthru
      _
    // Predicated region
    $region10: #{binary_sum_forward.1} parent=1 // pred_check
      _
    $region11: #{binary_sum_forward.1} parent=1 // pred_check_branch
      %34 = sbr.rel (0) target = $region13
    $region12: #{binary_sum_forward.1} parent=1 // pred_region
      _
    $region13: #{binary_sum_forward.1} parent=1 // pred_fallthru
      _
    // Predicated region
    $region14: #{binary_sum_forward.1} parent=1 // pred_check
      _
    $region15: #{binary_sum_forward.1} parent=1 // pred_check_branch
      %36 = sbr.rel (0) target = $region17
    $region16: #{binary_sum_forward.1} parent=1 // pred_region
      _
    $region17: #{binary_sum_forward.1} parent=1 // pred_fallthru
      _
    // Predicated region
    $region18: #{binary_sum_forward.1} parent=1 // pred_check
      _
    $region19: #{binary_sum_forward.1} parent=1 // pred_check_branch
      %38 = sbr.rel (0) target = $region21
    $region20: #{binary_sum_forward.1} parent=1 // pred_region
      %39 = dma.done [#allocation4], 128
    $region21: #{binary_sum_forward.1} parent=1 // pred_fallthru
      _
    // Predicated region
    $region22: #{binary_sum_forward.1} parent=1 // pred_check
      _
    $region23: #{binary_sum_forward.1} parent=1 // pred_check_branch
      %41 = sbr.rel (0) target = $region25
    $region24: #{binary_sum_forward.1} parent=1 // pred_region
      %42 = dma.done [#allocation6], 128
    $region25: #{binary_sum_forward.1} parent=1 // pred_fallthru
      _
    %v43 = vld [vmem:[#allocation3] sm:$0xff]
    %v44 = vld [vmem:[#allocation5] sm:$0xff]
    %v45 = vadd.f32 %v43, %v44
    %v46 = vld [vmem:[%s2] sm:$0x1]
    %v48 = vlaneseq
    %v49 = vshrl.u32 %v48, 7
    %v50 = vsub.s32 0, %v49
    %v51 = vrot.slane %v46, %v50
    %v53 = vmul.f32 %v45, %v51
    %54 = vadd.xlane.f32.xlu0 %v53
    %v55 = vpop.xlane.xlu0 %54
    %v56 = vld [vmem:[#allocation2] sm:$0x1]
    %v58 = vlaneseq
    %v59 = vshrl.u32 %v58, 7
    %v60 = vsub.s32 0, %v59
    %v61 = vrot.slane %v56, %v60
    %v63 = vadd.f32 %v55, %v61
    %vm64 = vcmask 7168
    %65 = vst.msk [vmem:[%s4] sm:$0xff] %vm64, %v63
    // Predicated region
    $region26: #{binary_sum_forward.1} parent=1 // pred_check
      _
    $region27: #{binary_sum_forward.1} parent=1 // pred_check_branch
      %67 = sbr.rel (0) target = $region29
    $region28: #{binary_sum_forward.1} parent=1 // pred_region
      _
    $region29: #{binary_sum_forward.1} parent=1 // pred_fallthru
      _
    // Predicated region
    $region30: #{binary_sum_forward.1} parent=1 // pred_check
      _
    $region31: #{binary_sum_forward.1} parent=1 // pred_check_branch
      %69 = sbr.rel (0) target = $region33
    $region32: #{binary_sum_forward.1} parent=1 // pred_region
      _
    $region33: #{binary_sum_forward.1} parent=1 // pred_fallthru
      _
    %70 = vsyncpa [#allocation4], 1
    %71 = vsyncpa [#allocation6], 1

</llo_original>
